<compile_context>
chip_gen: v7x
topology: tpu7x:2x2x1
jax: 0.10.0
libtpu: 0.0.40
codegen_flags: <defaults>
</compile_context>

<pallas_src>
import jax
import jax.numpy as jnp
from jax.experimental import pallas as pl
from jax.experimental.pallas import tpu as pltpu

hidden_dim = 10
output_dim = 1

P = 16          # padded feature dim (multiple of 8 sublanes; covers 10, 5, 1)
MAX_TILE_B = 512  # batch tile on the lane axis (multiple of 128)


def _mlp_kernel(x_ref, p_ref, o_ref):
    # x_ref : [P, TILE_B]   (features on sublanes, batch on lanes)
    # p_ref : [4, P, P]     planes 0..2 = zero-padded W1,W2,W3 ([out,in]); plane 3 = biases in cols 0..2
    # o_ref : [P, TILE_B]   row 0 carries the real scalar output
    xT = x_ref[...]                       # [P, B]
    w1 = p_ref[0]                         # [P, P]
    w2 = p_ref[1]
    w3 = p_ref[2]
    bmat = p_ref[3]                       # [P, P]; biases live in lane-columns 0,1,2
    b1 = bmat[:, 0:1]                     # [P, 1] -> broadcasts over batch lanes
    b2 = bmat[:, 1:2]
    b3 = bmat[:, 2:3]

    h1 = jnp.dot(w1, xT, preferred_element_type=jnp.float32) + b1
    h2 = jnp.dot(w2, h1, preferred_element_type=jnp.float32) + b2
    out = jnp.dot(w3, h2, preferred_element_type=jnp.float32) + b3
    o_ref[...] = out.astype(o_ref.dtype)


def pack_params(params):
    """Pack PyTorch-layout ([out,in]) weights + biases into one padded slab (done once)."""
    (w1, b1), (w2, b2), (w3, b3) = params
    slab = jnp.zeros((4, P, P), jnp.float32)
    slab = slab.at[0, : w1.shape[0], : w1.shape[1]].set(w1)
    slab = slab.at[1, : w2.shape[0], : w2.shape[1]].set(w2)
    slab = slab.at[2, : w3.shape[0], : w3.shape[1]].set(w3)
    slab = slab.at[3, : b1.shape[0], 0].set(b1)
    slab = slab.at[3, : b2.shape[0], 1].set(b2)
    slab = slab.at[3, : b3.shape[0], 2].set(b3)
    return slab


def label_predictor(x, slab):
    """x: [batch, hidden_dim] float32. Returns [batch, output_dim] float32."""
    B, D = x.shape
    # Lane-aligned batch tiling: tile is a multiple of 128, batch padded to a tile multiple.
    tile_b = min(MAX_TILE_B, pl.cdiv(max(B, 1), 128) * 128)
    Bp = pl.cdiv(B, tile_b) * tile_b

    # Transpose to batch-on-lanes and zero-pad features (10 -> P) and batch (B -> Bp).
    xT = jnp.zeros((P, Bp), jnp.float32).at[:D, :B].set(x.T)

    outT = pl.pallas_call(
        _mlp_kernel,
        out_shape=jax.ShapeDtypeStruct((P, Bp), jnp.float32),
        grid=(Bp // tile_b,),
        in_specs=[
            pl.BlockSpec((P, tile_b), lambda i: (0, i)),     # x tile, pipelined over batch
            pl.BlockSpec((4, P, P), lambda i: (0, 0, 0)),    # params: VMEM-resident, no re-DMA
        ],
        out_specs=pl.BlockSpec((P, tile_b), lambda i: (0, i)),
        compiler_params=pltpu.CompilerParams(
            dimension_semantics=("parallel",),               # v7x: shard batch tiles over both TCs
        ),
    )(xT, slab)

    # Row 0 is the real output; drop feature/batch padding and restore [B, out] layout.
    return outT[:output_dim, :B].T


def init_params(key):
    """PyTorch nn.Linear default init; weights in [out, in] layout, biases [out]."""
    dims = [
        (hidden_dim, hidden_dim),
        (hidden_dim, hidden_dim // 2),
        (hidden_dim // 2, output_dim),
    ]
    params = []
    for din, dout in dims:
        key, kw, kb = jax.random.split(key, 3)
        bound = 1.0 / (din ** 0.5)
        w = jax.random.uniform(kw, (dout, din), jnp.float32, -bound, bound)
        b = jax.random.uniform(kb, (dout,), jnp.float32, -bound, bound)
        params.append((w, b))
    return params


def reference(x, params):
    (w1, b1), (w2, b2), (w3, b3) = params
    h1 = x @ w1.T + b1
    h2 = h1 @ w2.T + b2
    return h2 @ w3.T + b3


if __name__ == "__main__":
    key = jax.random.PRNGKey(0)
    kx, kp = jax.random.split(key)
    batch = 8
    x = jax.random.normal(kx, (batch, hidden_dim), jnp.float32)
    params = init_params(kp)
    slab = pack_params(params)

    out = label_predictor(x, slab)
    out = jax.block_until_ready(out)

    ref = reference(x, params)
    assert out.shape == (batch, output_dim), out.shape
    # Tolerance allows for default-precision MXU (bf16 operand passes) vs XLA reference.
    assert jnp.allclose(out, ref, atol=1e-2, rtol=1e-2), "mismatch vs reference"
    print("KERNEL_OK")
</pallas_src>

<mosaic_0001>
module attributes {stable_mosaic.version = 11 : i64} {
  func.func @_mlp_kernel(%arg0: i32, %arg1: memref<16x128xf32, #tpu.memory_space<vmem>>, %arg2: memref<4x16x16xf32, #tpu.memory_space<vmem>>, %arg3: memref<16x128xf32, #tpu.memory_space<vmem>>) attributes {dimension_semantics = [#tpu.dimension_semantics<parallel>], iteration_bounds = array<i64: 1>, scalar_prefetch = 0 : i64, scratch_operands = 0 : i64, tpu.core_type = #tpu.core_type<tc>, window_params = [{transform_indices = @transform_0, window_bounds = array<i64: 16, 128>}, {pipeline_mode = #tpu.pipeline_mode<synchronous>, transform_indices = @transform_1, window_bounds = array<i64: 4, 16, 16>}, {transform_indices = @transform_2, window_bounds = array<i64: 16, 128>}]} {
    %c0 = arith.constant 0 : index
    %c0_0 = arith.constant 0 : index
    %0 = vector.load %arg1[%c0, %c0_0] : memref<16x128xf32, #tpu.memory_space<vmem>>, vector<16x128xf32>
    %c0_1 = arith.constant 0 : index
    %c0_2 = arith.constant 0 : index
    %c0_3 = arith.constant 0 : index
    %1 = vector.load %arg2[%c0_1, %c0_2, %c0_3] : memref<4x16x16xf32, #tpu.memory_space<vmem>>, vector<1x16x16xf32>
    %2 = vector.shape_cast %1 : vector<1x16x16xf32> to vector<16x16xf32>
    %c1 = arith.constant 1 : index
    %c0_4 = arith.constant 0 : index
    %c0_5 = arith.constant 0 : index
    %3 = vector.load %arg2[%c1, %c0_4, %c0_5] : memref<4x16x16xf32, #tpu.memory_space<vmem>>, vector<1x16x16xf32>
    %4 = vector.shape_cast %3 : vector<1x16x16xf32> to vector<16x16xf32>
    %c2 = arith.constant 2 : index
    %c0_6 = arith.constant 0 : index
    %c0_7 = arith.constant 0 : index
    %5 = vector.load %arg2[%c2, %c0_6, %c0_7] : memref<4x16x16xf32, #tpu.memory_space<vmem>>, vector<1x16x16xf32>
    %6 = vector.shape_cast %5 : vector<1x16x16xf32> to vector<16x16xf32>
    %c3 = arith.constant 3 : index
    %c0_8 = arith.constant 0 : index
    %c0_9 = arith.constant 0 : index
    %7 = vector.load %arg2[%c3, %c0_8, %c0_9] : memref<4x16x16xf32, #tpu.memory_space<vmem>>, vector<1x16x16xf32>
    %8 = vector.shape_cast %7 : vector<1x16x16xf32> to vector<16x16xf32>
    %9 = vector.extract_strided_slice %8 {offsets = [0, 0], sizes = [16, 1], strides = [1, 1]} : vector<16x16xf32> to vector<16x1xf32>
    %10 = vector.extract_strided_slice %8 {offsets = [0, 1], sizes = [16, 1], strides = [1, 1]} : vector<16x16xf32> to vector<16x1xf32>
    %11 = vector.extract_strided_slice %8 {offsets = [0, 2], sizes = [16, 1], strides = [1, 1]} : vector<16x16xf32> to vector<16x1xf32>
    %cst = arith.constant dense<0.000000e+00> : vector<16x128xf32>
    %12 = tpu.matmul %2, %0, %cst {dimension_numbers = #tpu.dot_dimension_numbers<[1], [0], [0], [1], [0, 0, 1, 1], [], []>} : vector<16x16xf32>, vector<16x128xf32>, vector<16x128xf32> -> vector<16x128xf32>
    %13 = vector.broadcast %9 : vector<16x1xf32> to vector<16x128xf32>
    %14 = arith.addf %12, %13 : vector<16x128xf32>
    %cst_10 = arith.constant dense<0.000000e+00> : vector<16x128xf32>
    %15 = tpu.matmul %4, %14, %cst_10 {dimension_numbers = #tpu.dot_dimension_numbers<[1], [0], [0], [1], [0, 0, 1, 1], [], []>} : vector<16x16xf32>, vector<16x128xf32>, vector<16x128xf32> -> vector<16x128xf32>
    %16 = vector.broadcast %10 : vector<16x1xf32> to vector<16x128xf32>
    %17 = arith.addf %15, %16 : vector<16x128xf32>
    %cst_11 = arith.constant dense<0.000000e+00> : vector<16x128xf32>
    %18 = tpu.matmul %6, %17, %cst_11 {dimension_numbers = #tpu.dot_dimension_numbers<[1], [0], [0], [1], [0, 0, 1, 1], [], []>} : vector<16x16xf32>, vector<16x128xf32>, vector<16x128xf32> -> vector<16x128xf32>
    %19 = vector.broadcast %11 : vector<16x1xf32> to vector<16x128xf32>
    %20 = arith.addf %18, %19 : vector<16x128xf32>
    %c0_12 = arith.constant 0 : index
    %c0_13 = arith.constant 0 : index
    %21 = vector.load %arg3[%c0_12, %c0_13] : memref<16x128xf32, #tpu.memory_space<vmem>>, vector<16x128xf32>
    tpu.vector_store %arg3[%c0_12, %c0_13], %20 {strides = array<i32>} : memref<16x128xf32, #tpu.memory_space<vmem>>, vector<16x128xf32>,
    return
  }
  func.func @transform_0(%arg0: i32) -> (i32, i32) {
    %c0_i32 = arith.constant 0 : i32
    %c0_i32_0 = arith.constant 0 : i32
    return %c0_i32, %arg0 : i32, i32
  }
  func.func @transform_1(%arg0: i32) -> (i32, i32, i32) {
    %c0_i32 = arith.constant 0 : i32
    %c0_i32_0 = arith.constant 0 : i32
    %c0_i32_1 = arith.constant 0 : i32
    %c0_i32_2 = arith.constant 0 : i32
    return %c0_i32, %c0_i32_0, %c0_i32_1 : i32, i32, i32
  }
  func.func @transform_2(%arg0: i32) -> (i32, i32) {
    %c0_i32 = arith.constant 0 : i32
    %c0_i32_0 = arith.constant 0 : i32
    return %c0_i32, %arg0 : i32, i32
  }
}

</mosaic_0001>

<llo_original>
// kernel: tpu_custom_call.1
$region0: #{tpu_custom_call.1}
  #allocation0 [shape = 'u32[]', space=smem, size = 0x4, offset = 0x4, fixed_abs, tag = 'smem constant byte address 0x4 - core index']
  #allocation1 [shape = 'u32[144,128]{1,0:T(1,128)}', space=vmem, size = 0x12000, scoped, tag = 'internal scratch']
  %s0 = inlined_call_operand.hbm [shape: f32[16,128], index: 0, kind: input, shape index: {}]
  %s1 = inlined_call_operand.hbm [shape: f32[4,16,16], index: 1, kind: input, shape index: {}]
  %s2 = inlined_call_operand.hbm [shape: f32[16,128], index: 2, kind: output, shape index: {}]
  %s3 = sld [smem:[#allocation0]]
  $region26: #{tpu_custom_call.1} parent=0
    _
  %s5 = ssub.s32 1, %s3
  %s6 = scalar_select 0, %s5, %s3
  $region1: #{tpu_custom_call.1} parent=0
    #allocation2 [shape = 'u8[8192]{0}', space=vmem, size = 0x2000, scoped, tag = 'input window, operand 0, single buffered']
    #allocation3 [shape = 's32[1]{0}', space=sflag, size = 0x4, scoped, tag = 'scoped memory for tpu_custom_call.1']
    #allocation4 [shape = 's32[1]{0}', space=sflag, size = 0x4, scoped, tag = 'scoped memory for tpu_custom_call.1']
    #allocation5 [shape = 'u8[32768]{0}', space=vmem, size = 0x8000, scoped, tag = 'input window, operand 1, single buffered']
    #allocation6 [shape = 's32[1]{0}', space=sflag, size = 0x4, scoped, tag = 'scoped memory for tpu_custom_call.1']
    #allocation7 [shape = 'u8[8192]{0}', space=vmem, size = 0x2000, scoped, tag = 'output window, operand 0, single buffered']
    %7 = vsyncpa [#allocation3], 0
    %8 = vsyncpa [#allocation6], 0
    %9 = vsyncpa [#allocation4], 0
    // Predicated region
    $region2: #{tpu_custom_call.1} parent=1 // pred_check
      _
    $region3: #{tpu_custom_call.1} parent=1 // pred_check_branch
      %11 = sbr.rel (0) target = $region5
    $region4: #{tpu_custom_call.1} parent=1 // pred_region
      %s13 = ssub.s32 256, 256
      %14 = vsyncadd [#allocation3], %s13
      %s15 = sshll.u32 [#allocation2], 4
      %s16 = int_to_ptr.vmem [resolvable:$true] %s15
      %21 = dma.hbm_to_vmem [thread:$0]  %s0, 256, %s16, [#allocation3], 128, 128, 8
    $region5: #{tpu_custom_call.1} parent=1 // pred_fallthru
      _
    // Predicated region
    $region6: #{tpu_custom_call.1} parent=1 // pred_check
      _
    $region7: #{tpu_custom_call.1} parent=1 // pred_check_branch
      %23 = sbr.rel (0) target = $region9
    $region8: #{tpu_custom_call.1} parent=1 // pred_region
      %s25 = ssub.s32 1024, 1024
      %26 = vsyncadd [#allocation6], %s25
      %s27 = sshll.u32 [#allocation5], 4
      %s28 = int_to_ptr.vmem [resolvable:$true] %s27
      %33 = dma.hbm_to_vmem [thread:$0]  %s1, 1024, %s28, [#allocation6], 128, 128, 8
    $region9: #{tpu_custom_call.1} parent=1 // pred_fallthru
      _
    // Predicated region
    $region10: #{tpu_custom_call.1} parent=1 // pred_check
      _
    $region11: #{tpu_custom_call.1} parent=1 // pred_check_branch
      %35 = sbr.rel (0) target = $region13
    $region12: #{tpu_custom_call.1} parent=1 // pred_region
      %36 = dma.done [#allocation3], 256
    $region13: #{tpu_custom_call.1} parent=1 // pred_fallthru
      _
    // Predicated region
    $region14: #{tpu_custom_call.1} parent=1 // pred_check
      _
    $region15: #{tpu_custom_call.1} parent=1 // pred_check_branch
      %38 = sbr.rel (0) target = $region17
    $region16: #{tpu_custom_call.1} parent=1 // pred_region
      %39 = dma.done [#allocation6], 1024
    $region17: #{tpu_custom_call.1} parent=1 // pred_fallthru
      _
    %v40 = vld [vmem:[#allocation2] sm:$0xff]
    %v41 = vld [vmem:[#allocation2 + $0x8] sm:$0xff]
    %v42 = vld [vmem:[#allocation5] sm:$0xff]
    %v43 = vld [vmem:[#allocation5 + $0x8] sm:$0xff]
    %s44 = scalar_lea.vmem [#allocation5], 16
    %v45 = vld [vmem:[%s44] sm:$0xff]
    %v46 = vld [vmem:[%s44 + $0x8] sm:$0xff]
    %s47 = scalar_lea.vmem [#allocation5], 32
    %v48 = vld [vmem:[%s47] sm:$0xff]
    %v49 = vld [vmem:[%s47 + $0x8] sm:$0xff]
    %s50 = scalar_lea.vmem [#allocation5], 48
    %v51 = vld [vmem:[%s50] sm:$0xff]
    %v52 = vld [vmem:[%s50 + $0x8] sm:$0xff]
    %54 = vset.pattern.permute.xlu0 0
    %55 = vperm.xlu0 %54, %v51
    %v56 = vpop.permute.xlu0 %55
    %59 = vset.pattern.permute.xlu0 0
    %60 = vperm.xlu0 %59, %v52
    %v61 = vpop.permute.xlu0 %60
    %vm63 = vcmask 130048
    %v65 = vsel %vm63, %v42, 0
    %v68 = vsel %vm63, %v43, 0
    %70 = vmatprep.subr.mxu0 0.0
    %71 = vmatpush1.msra.mxu0 %v40
    %72 = vmatprep.subr.mxu0 0.0
    %73 = vmatpush1.msra.mxu0 %v41
    %74 = vmatprep.subr.mxu0 0.0
    %75 = vmatpush1.msra.mxu0 0.0
    %76 = vmatprep.subr.mxu0 0.0
    %77 = vmatpush1.msra.mxu0 0.0
    %78 = vmatprep.subr.mxu0 0.0
    %79 = vmatpush1.msra.mxu0 0.0
    %80 = vmatprep.subr.mxu0 0.0
    %81 = vmatpush1.msra.mxu0 0.0
    %82 = vmatprep.subr.mxu0 0.0
    %83 = vmatpush1.msra.mxu0 0.0
    %84 = vmatprep.subr.mxu0 0.0
    %85 = vmatpush1.msra.mxu0 0.0
    %86 = vmatprep.subr.mxu0 0.0
    %87 = vmatpush1.msra.mxu0 0.0
    %88 = vmatprep.subr.mxu0 0.0
    %89 = vmatpush1.msra.mxu0 0.0
    %90 = vmatprep.subr.mxu0 0.0
    %91 = vmatpush1.msra.mxu0 0.0
    %92 = vmatprep.subr.mxu0 0.0
    %93 = vmatpush1.msra.mxu0 0.0
    %94 = vmatprep.subr.mxu0 0.0
    %95 = vmatpush1.msra.mxu0 0.0
    %96 = vmatprep.subr.mxu0 0.0
    %97 = vmatpush1.msra.mxu0 0.0
    %98 = vmatprep.subr.mxu0 0.0
    %99 = vmatpush1.msra.mxu0 0.0
    %100 = vmatprep.subr.mxu0 0.0
    %101 = vmatpush1.msra.mxu0 0.0
    %102 = vmatprep.subr.mxu0 0.0
    %103 = vmatpush1.msra.mxu0 0.0
    %104 = vmatprep.subr.mxu0 0.0
    %105 = vmatpush1.msra.mxu0 0.0
    %106 = vmatprep.subr.mxu0 0.0
    %107 = vmatpush1.msra.mxu0 0.0
    %108 = vmatprep.subr.mxu0 0.0
    %109 = vmatpush1.msra.mxu0 0.0
    %110 = vmatprep.subr.mxu0 0.0
    %111 = vmatpush1.msra.mxu0 0.0
    %112 = vmatprep.subr.mxu0 0.0
    %113 = vmatpush1.msra.mxu0 0.0
    %114 = vmatprep.subr.mxu0 0.0
    %115 = vmatpush1.msra.mxu0 0.0
    %116 = vmatprep.subr.mxu0 0.0
    %117 = vmatpush1.msra.mxu0 0.0
    %118 = vmatprep.subr.mxu0 0.0
    %119 = vmatpush1.msra.mxu0 0.0
    %120 = vmatprep.subr.mxu0 0.0
    %121 = vmatpush1.msra.mxu0 0.0
    %122 = vmatprep.subr.mxu0 0.0
    %123 = vmatpush1.msra.mxu0 0.0
    %124 = vmatprep.subr.mxu0 0.0
    %125 = vmatpush1.msra.mxu0 0.0
    %126 = vmatprep.subr.mxu0 0.0
    %127 = vmatpush1.msra.mxu0 0.0
    %128 = vmatprep.subr.mxu0 0.0
    %129 = vmatpush1.msra.mxu0 0.0
    %130 = vmatprep.subr.mxu0 0.0
    %131 = vmatpush1.msra.mxu0 0.0
    %132 = vmatprep.subr.mxu0 0.0
    %133 = vmatpush1.msra.mxu0 0.0
    %134 = vmatprep.mubr.f32.mxu0 0.0
    %135 = vmatmul.mubr.f32.gmra.mrb[0].mxu0 %v65
    %v136 = vpop.f32.mrb[0].mxu0
    %v137 = vadd.f32 %v56, %v136
    %v138 = vpop.f32.mrb[0].mxu0
    %139 = vmatprep.mubr.f32.mxu0 0.0
    %140 = vmatmul.mubr.f32.gmra.mrb[0].mxu0 %v68
    %v141 = vpop.f32.mrb[0].mxu0
    %v142 = vadd.f32 %v61, %v141
    %v143 = vpop.f32.mrb[0].mxu0
    %144 = vdwg.mxu0
    %145 = vset.pattern.permute.xlu0 1
    %146 = vperm.xlu0 %145, %v51
    %v147 = vpop.permute.xlu0 %146
    %149 = vset.pattern.permute.xlu0 1
    %150 = vperm.xlu0 %149, %v52
    %v151 = vpop.permute.xlu0 %150
    %v154 = vsel %vm63, %v45, 0
    %v157 = vsel %vm63, %v46, 0
    %159 = vmatprep.subr.mxu0 0.0
    %160 = vmatpush1.msra.mxu0 %v137
    %161 = vmatprep.subr.mxu0 0.0
    %162 = vmatpush1.msra.mxu0 %v142
    %163 = vmatprep.subr.mxu0 0.0
    %164 = vmatpush1.msra.mxu0 0.0
    %165 = vmatprep.subr.mxu0 0.0
    %166 = vmatpush1.msra.mxu0 0.0
    %167 = vmatprep.subr.mxu0 0.0
    %168 = vmatpush1.msra.mxu0 0.0
    %169 = vmatprep.subr.mxu0 0.0
    %170 = vmatpush1.msra.mxu0 0.0
    %171 = vmatprep.subr.mxu0 0.0
    %172 = vmatpush1.msra.mxu0 0.0
    %173 = vmatprep.subr.mxu0 0.0
    %174 = vmatpush1.msra.mxu0 0.0
    %175 = vmatprep.subr.mxu0 0.0
    %176 = vmatpush1.msra.mxu0 0.0
    %177 = vmatprep.subr.mxu0 0.0
    %178 = vmatpush1.msra.mxu0 0.0
    %179 = vmatprep.subr.mxu0 0.0
    %180 = vmatpush1.msra.mxu0 0.0
    %181 = vmatprep.subr.mxu0 0.0
    %182 = vmatpush1.msra.mxu0 0.0
    %183 = vmatprep.subr.mxu0 0.0
    %184 = vmatpush1.msra.mxu0 0.0
    %185 = vmatprep.subr.mxu0 0.0
    %186 = vmatpush1.msra.mxu0 0.0
    %187 = vmatprep.subr.mxu0 0.0
    %188 = vmatpush1.msra.mxu0 0.0
    %189 = vmatprep.subr.mxu0 0.0
    %190 = vmatpush1.msra.mxu0 0.0
    %191 = vmatprep.subr.mxu0 0.0
    %192 = vmatpush1.msra.mxu0 0.0
    %193 = vmatprep.subr.mxu0 0.0
    %194 = vmatpush1.msra.mxu0 0.0
    %195 = vmatprep.subr.mxu0 0.0
    %196 = vmatpush1.msra.mxu0 0.0
    %197 = vmatprep.subr.mxu0 0.0
    %198 = vmatpush1.msra.mxu0 0.0
    %199 = vmatprep.subr.mxu0 0.0
    %200 = vmatpush1.msra.mxu0 0.0
    %201 = vmatprep.subr.mxu0 0.0
    %202 = vmatpush1.msra.mxu0 0.0
    %203 = vmatprep.subr.mxu0 0.0
    %204 = vmatpush1.msra.mxu0 0.0
    %205 = vmatprep.subr.mxu0 0.0
    %206 = vmatpush1.msra.mxu0 0.0
    %207 = vmatprep.subr.mxu0 0.0
    %208 = vmatpush1.msra.mxu0 0.0
    %209 = vmatprep.subr.mxu0 0.0
    %210 = vmatpush1.msra.mxu0 0.0
    %211 = vmatprep.subr.mxu0 0.0
    %212 = vmatpush1.msra.mxu0 0.0
    %213 = vmatprep.subr.mxu0 0.0
    %214 = vmatpush1.msra.mxu0 0.0
    %215 = vmatprep.subr.mxu0 0.0
    %216 = vmatpush1.msra.mxu0 0.0
    %217 = vmatprep.subr.mxu0 0.0
    %218 = vmatpush1.msra.mxu0 0.0
    %219 = vmatprep.subr.mxu0 0.0
    %220 = vmatpush1.msra.mxu0 0.0
    %221 = vmatprep.subr.mxu0 0.0
    %222 = vmatpush1.msra.mxu0 0.0
    %223 = vmatprep.mubr.f32.mxu0 0.0
    %224 = vmatmul.mubr.f32.gmra.mrb[0].mxu0 %v154
    %v225 = vpop.f32.mrb[0].mxu0
    %v226 = vadd.f32 %v147, %v225
    %v227 = vpop.f32.mrb[0].mxu0
    %228 = vmatprep.mubr.f32.mxu0 0.0
    %229 = vmatmul.mubr.f32.gmra.mrb[0].mxu0 %v157
    %v230 = vpop.f32.mrb[0].mxu0
    %v231 = vadd.f32 %v151, %v230
    %v232 = vpop.f32.mrb[0].mxu0
    %233 = vdwg.mxu0
    %234 = vset.pattern.permute.xlu0 2
    %235 = vperm.xlu0 %234, %v51
    %v236 = vpop.permute.xlu0 %235
    %238 = vset.pattern.permute.xlu0 2
    %239 = vperm.xlu0 %238, %v52
    %v240 = vpop.permute.xlu0 %239
    %v243 = vsel %vm63, %v48, 0
    %v246 = vsel %vm63, %v49, 0
    %248 = vmatprep.subr.mxu0 0.0
    %249 = vmatpush1.msra.mxu0 %v226
    %250 = vmatprep.subr.mxu0 0.0
    %251 = vmatpush1.msra.mxu0 %v231
    %252 = vmatprep.subr.mxu0 0.0
    %253 = vmatpush1.msra.mxu0 0.0
    %254 = vmatprep.subr.mxu0 0.0
    %255 = vmatpush1.msra.mxu0 0.0
    %256 = vmatprep.subr.mxu0 0.0
    %257 = vmatpush1.msra.mxu0 0.0
    %258 = vmatprep.subr.mxu0 0.0
    %259 = vmatpush1.msra.mxu0 0.0
    %260 = vmatprep.subr.mxu0 0.0
    %261 = vmatpush1.msra.mxu0 0.0
    %262 = vmatprep.subr.mxu0 0.0
    %263 = vmatpush1.msra.mxu0 0.0
    %264 = vmatprep.subr.mxu0 0.0
    %265 = vmatpush1.msra.mxu0 0.0
    %266 = vmatprep.subr.mxu0 0.0
    %267 = vmatpush1.msra.mxu0 0.0
    %268 = vmatprep.subr.mxu0 0.0
    %269 = vmatpush1.msra.mxu0 0.0
    %270 = vmatprep.subr.mxu0 0.0
    %271 = vmatpush1.msra.mxu0 0.0
    %272 = vmatprep.subr.mxu0 0.0
    %273 = vmatpush1.msra.mxu0 0.0
    %274 = vmatprep.subr.mxu0 0.0
    %275 = vmatpush1.msra.mxu0 0.0
    %276 = vmatprep.subr.mxu0 0.0
    %277 = vmatpush1.msra.mxu0 0.0
    %278 = vmatprep.subr.mxu0 0.0
    %279 = vmatpush1.msra.mxu0 0.0
    %280 = vmatprep.subr.mxu0 0.0
    %281 = vmatpush1.msra.mxu0 0.0
    %282 = vmatprep.subr.mxu0 0.0
    %283 = vmatpush1.msra.mxu0 0.0
    %284 = vmatprep.subr.mxu0 0.0
    %285 = vmatpush1.msra.mxu0 0.0
    %286 = vmatprep.subr.mxu0 0.0
    %287 = vmatpush1.msra.mxu0 0.0
    %288 = vmatprep.subr.mxu0 0.0
    %289 = vmatpush1.msra.mxu0 0.0
    %290 = vmatprep.subr.mxu0 0.0
    %291 = vmatpush1.msra.mxu0 0.0
    %292 = vmatprep.subr.mxu0 0.0
    %293 = vmatpush1.msra.mxu0 0.0
    %294 = vmatprep.subr.mxu0 0.0
    %295 = vmatpush1.msra.mxu0 0.0
    %296 = vmatprep.subr.mxu0 0.0
    %297 = vmatpush1.msra.mxu0 0.0
    %298 = vmatprep.subr.mxu0 0.0
    %299 = vmatpush1.msra.mxu0 0.0
    %300 = vmatprep.subr.mxu0 0.0
    %301 = vmatpush1.msra.mxu0 0.0
    %302 = vmatprep.subr.mxu0 0.0
    %303 = vmatpush1.msra.mxu0 0.0
    %304 = vmatprep.subr.mxu0 0.0
    %305 = vmatpush1.msra.mxu0 0.0
    %306 = vmatprep.subr.mxu0 0.0
    %307 = vmatpush1.msra.mxu0 0.0
    %308 = vmatprep.subr.mxu0 0.0
    %309 = vmatpush1.msra.mxu0 0.0
    %310 = vmatprep.subr.mxu0 0.0
    %311 = vmatpush1.msra.mxu0 0.0
    %312 = vmatprep.mubr.f32.mxu0 0.0
    %313 = vmatmul.mubr.f32.gmra.mrb[0].mxu0 %v243
    %v314 = vpop.f32.mrb[0].mxu0
    %v315 = vadd.f32 %v236, %v314
    %v316 = vpop.f32.mrb[0].mxu0
    %317 = vmatprep.mubr.f32.mxu0 0.0
    %318 = vmatmul.mubr.f32.gmra.mrb[0].mxu0 %v246
    %v319 = vpop.f32.mrb[0].mxu0
    %v320 = vadd.f32 %v240, %v319
    %v321 = vpop.f32.mrb[0].mxu0
    %322 = vdwg.mxu0
    %323 = vst [vmem:[#allocation7] sm:$0xff] %v315
    %324 = vst [vmem:[#allocation7 + $0x8] sm:$0xff] %v320
    // Predicated region
    $region18: #{tpu_custom_call.1} parent=1 // pred_check
      _
    $region19: #{tpu_custom_call.1} parent=1 // pred_check_branch
      %326 = sbr.rel (0) target = $region21
    $region20: #{tpu_custom_call.1} parent=1 // pred_region
      %s328 = ssub.s32 256, 256
      %329 = vsyncadd [#allocation4], %s328
      %s330 = sshll.u32 [#allocation7], 4
      %s331 = int_to_ptr.vmem [resolvable:$true] %s330
      %336 = dma.vmem_to_hbm [thread:$0]  %s331, 256, %s2, [#allocation4], 128, 128, 8
    $region21: #{tpu_custom_call.1} parent=1 // pred_fallthru
      _
    // Predicated region
    $region22: #{tpu_custom_call.1} parent=1 // pred_check
      _
    $region23: #{tpu_custom_call.1} parent=1 // pred_check_branch
      %338 = sbr.rel (0) target = $region25
    $region24: #{tpu_custom_call.1} parent=1 // pred_region
      %339 = dma.done [#allocation4], 256
    $region25: #{tpu_custom_call.1} parent=1 // pred_fallthru
      _
    %340 = vsyncpa [#allocation3], 1
    %341 = vsyncpa [#allocation6], 1
    %342 = vsyncpa [#allocation4], 1

</llo_original>
